<compile_context>
chip_gen: v7x
topology: tpu7x:2x2x1
jax: 0.10.0
libtpu: 0.0.40
codegen_flags: <defaults>
</compile_context>

<pallas_src>
import functools
import math

import jax
import jax.numpy as jnp
from jax.experimental import pallas as pl
from jax.experimental.pallas import tpu as pltpu

LN_EPS = 1e-12


# ----------------------- generation-aware VMEM budget --------------------------

@functools.lru_cache(maxsize=None)
def _vmem_caps():
    """Returns (vmem_limit_bytes, tile_budget_bytes) for the local TPU generation.

    v7x has 64 MiB of physical VMEM per TensorCore -> cap the scoped limit near
    ~52 MiB; v5e/v6e have 128 MiB -> use ~100 MiB.  Tiles are sized against a
    slightly smaller budget to leave the compiler headroom for its own scratch.
    """
    try:
        cap = int(pltpu.get_tpu_info().vmem_capacity_bytes)
    except Exception:  # older runtimes / interpret mode
        cap = 64 * 1024 * 1024
    limit = min(int(cap * 0.82), 100 * 1024 * 1024)
    return limit, int(limit * 0.85)


def _divisor_tile(dim, target, align):
    """Largest multiple of `align` that divides `dim` and is <= target.

    Falls back to the full dim (a full-extent block is always legal)."""
    if dim <= target:
        return dim
    t = (target // align) * align
    while t >= align:
        if dim % t == 0:
            return t
        t -= align
    return dim


def _shrink_tm(M, tm, footprint, budget):
    """Halve the M tile until the estimated VMEM footprint fits the budget."""
    while footprint(tm) > budget and tm > 8:
        nxt = _divisor_tile(M, max(tm // 2, 8), 8)
        if nxt >= tm:
            break
        tm = nxt
    return tm


# --------------------- tiled linear (+ optional activation) --------------------

def _linear_kernel(x_ref, w_ref, b_ref, o_ref, acc_ref, *, act):
    @pl.when(pl.program_id(2) == 0)
    def _init():
        acc_ref[...] = jnp.zeros_like(acc_ref)

    acc_ref[...] += jnp.dot(x_ref[...], w_ref[...],
                            preferred_element_type=jnp.float32)

    @pl.when(pl.program_id(2) == pl.num_programs(2) - 1)
    def _finalize():
        y = acc_ref[...] + b_ref[...].astype(jnp.float32)
        if act == "gelu":
            # Exact (erf) GELU, matching HF BERT.
            # TODO(synk): on v5e a tanh-approx GELU would move the epilogue off
            # the f32-only VALU (tanh runs on the EUP); kept exact for parity.
            y = 0.5 * y * (1.0 + jax.lax.erf(y * (1.0 / math.sqrt(2.0))))
        elif act == "tanh":
            y = jnp.tanh(y)
        o_ref[...] = y.astype(o_ref.dtype)


def pallas_linear(x2d, w, b, act=None, out_dtype=jnp.bfloat16):
    M, K = x2d.shape
    N = w.shape[1]
    vmem_limit, budget = _vmem_caps()
    # Full-K contraction (single K step), full-N output for H-sized matmuls,
    # 256-aligned 1536-wide tiles for the wide FFN output (avoids 384-wide
    # tiles that under-fill the 256x256 MXU on v6e/v7x).
    tk = K
    tn = N if N <= 1024 else _divisor_tile(N, 1536, 256)

    def fp(tm):  # double-buffered x/w/out panes + f32 accumulator + bias
        return (2 * tm * tk * 2 + 2 * tk * tn * 2 + 2 * tm * tn * 2
                + tm * tn * 4 + 8 * tn)

    tm = _shrink_tm(M, _divisor_tile(M, 2048, 8), fp, budget)
    grid = (M // tm, N // tn, K // tk)
    cost = pl.CostEstimate(
        flops=2 * M * N * K,
        transcendentals=M * N if act else 0,
        bytes_accessed=2 * (M * K + K * N + M * N))
    return pl.pallas_call(
        functools.partial(_linear_kernel, act=act),
        out_shape=jax.ShapeDtypeStruct((M, N), out_dtype),
        grid=grid,
        in_specs=[
            pl.BlockSpec((tm, tk), lambda i, j, k: (i, k)),
            pl.BlockSpec((tk, tn), lambda i, j, k: (k, j)),
            pl.BlockSpec((1, tn), lambda i, j, k: (0, j)),
        ],
        out_specs=pl.BlockSpec((tm, tn), lambda i, j, k: (i, j)),
        scratch_shapes=[pltpu.VMEM((tm, tn), jnp.float32)],
        compiler_params=pltpu.CompilerParams(
            dimension_semantics=("parallel", "parallel", "arbitrary"),
            vmem_limit_bytes=vmem_limit),
        cost_estimate=cost,
    )(x2d, w, b.reshape(1, N))


# --------------- tiled linear with fused residual-add + LayerNorm --------------

def _linear_add_ln_kernel(x_ref, w_ref, b_ref, r_ref, g_ref, bt_ref,
                          o_ref, acc_ref):
    @pl.when(pl.program_id(1) == 0)
    def _init():
        acc_ref[...] = jnp.zeros_like(acc_ref)

    acc_ref[...] += jnp.dot(x_ref[...], w_ref[...],
                            preferred_element_type=jnp.float32)

    @pl.when(pl.program_id(1) == pl.num_programs(1) - 1)
    def _finalize():
        h = (acc_ref[...] + b_ref[...].astype(jnp.float32)
             + r_ref[...].astype(jnp.float32))
        mu = jnp.mean(h, axis=-1, keepdims=True)
        var = jnp.mean(jnp.square(h - mu), axis=-1, keepdims=True)
        normed = (h - mu) * jax.lax.rsqrt(var + LN_EPS)
        o_ref[...] = (normed * g_ref[...].astype(jnp.float32)
                      + bt_ref[...].astype(jnp.float32)).astype(o_ref.dtype)


def pallas_linear_add_ln(x2d, w, b, res2d, gamma, beta, out_dtype=jnp.bfloat16):
    M, K = x2d.shape
    N = w.shape[1]            # LayerNorm needs the full row -> N is not tiled
    vmem_limit, budget = _vmem_caps()
    tk = K                    # full-K: one K step, no accumulator RMW churn

    def fp(tm):  # x, w, residual, out (double-buffered) + f32 acc + LN params
        return (2 * tm * tk * 2 + 2 * tk * N * 2 + 2 * tm * N * 2
                + 2 * tm * N * 2 + tm * N * 4 + 16 * N)

    tm = _shrink_tm(M, _divisor_tile(M, 2048, 8), fp, budget)
    grid = (M // tm, K // tk)
    cost = pl.CostEstimate(
        flops=2 * M * N * K,
        transcendentals=0,
        bytes_accessed=2 * (M * K + K * N + 2 * M * N))
    return pl.pallas_call(
        _linear_add_ln_kernel,
        out_shape=jax.ShapeDtypeStruct((M, N), out_dtype),
        grid=grid,
        in_specs=[
            pl.BlockSpec((tm, tk), lambda i, k: (i, k)),
            pl.BlockSpec((tk, N), lambda i, k: (k, 0)),
            pl.BlockSpec((1, N), lambda i, k: (0, 0)),
            pl.BlockSpec((tm, N), lambda i, k: (i, 0)),
            pl.BlockSpec((1, N), lambda i, k: (0, 0)),
            pl.BlockSpec((1, N), lambda i, k: (0, 0)),
        ],
        out_specs=pl.BlockSpec((tm, N), lambda i, k: (i, 0)),
        scratch_shapes=[pltpu.VMEM((tm, N), jnp.float32)],
        compiler_params=pltpu.CompilerParams(
            dimension_semantics=("parallel", "arbitrary"),
            vmem_limit_bytes=vmem_limit),
        cost_estimate=cost,
    )(x2d, w, b.reshape(1, N), res2d, gamma.reshape(1, N), beta.reshape(1, N))


# ----------------------------- row-tiled LayerNorm -----------------------------

def _ln_kernel(x_ref, g_ref, b_ref, o_ref):
    h = x_ref[...].astype(jnp.float32)       # stats in f32, input may be bf16
    mu = jnp.mean(h, axis=-1, keepdims=True)
    var = jnp.mean(jnp.square(h - mu), axis=-1, keepdims=True)
    normed = (h - mu) * jax.lax.rsqrt(var + LN_EPS)
    o_ref[...] = (normed * g_ref[...].astype(jnp.float32)
                  + b_ref[...].astype(jnp.float32)).astype(o_ref.dtype)


def pallas_layernorm(x2d, gamma, beta, out_dtype=jnp.bfloat16):
    M, H = x2d.shape
    vmem_limit, _ = _vmem_caps()
    tm = _divisor_tile(M, 1024, 8)
    return pl.pallas_call(
        _ln_kernel,
        out_shape=jax.ShapeDtypeStruct((M, H), out_dtype),
        grid=(M // tm,),
        in_specs=[
            pl.BlockSpec((tm, H), lambda i: (i, 0)),
            pl.BlockSpec((1, H), lambda i: (0, 0)),
            pl.BlockSpec((1, H), lambda i: (0, 0)),
        ],
        out_specs=pl.BlockSpec((tm, H), lambda i: (i, 0)),
        compiler_params=pltpu.CompilerParams(
            dimension_semantics=("parallel",),
            vmem_limit_bytes=vmem_limit),
    )(x2d, gamma.reshape(1, H), beta.reshape(1, H))


# ------------------ fused QKV projection + multi-head attention ----------------

def _mha_kernel(x_ref, wqkv_ref, bqkv_ref, m_ref, o_ref,
                *, n_heads, head_dim, hidden, scale):
    # Fused QKV projection: one full-occupancy (S, H) @ (H, 3H) MXU matmul per
    # sequence; the (B*S, 3H) QKV activation never touches HBM.
    qkv = jnp.dot(x_ref[...], wqkv_ref[...],
                  preferred_element_type=jnp.float32)
    qkv = qkv + bqkv_ref[...].astype(jnp.float32)          # (S, 3H) f32
    mask = m_ref[...].astype(jnp.float32)                  # (1, S) additive key mask
    # 128-aligned slab slices (H is a multiple of 128 at BERT scale).
    q_all = qkv[:, :hidden].astype(jnp.bfloat16)
    k_all = qkv[:, hidden:2 * hidden].astype(jnp.bfloat16)
    v_all = qkv[:, 2 * hidden:].astype(jnp.bfloat16)
    for h in range(n_heads):                                # static unrolled loop
        lo = h * head_dim
        q = q_all[:, lo:lo + head_dim]
        k = k_all[:, lo:lo + head_dim]
        v = v_all[:, lo:lo + head_dim]
        # Q @ K^T without transposing K: contract the last dims of both.
        s = jax.lax.dot_general(q, k, (((1,), (1,)), ((), ())),
                                preferred_element_type=jnp.float32)   # (S, S)
        s = s * scale + mask              # scale applied to f32 scores (exact)
        s = s - jnp.max(s, axis=-1, keepdims=True)
        p = jnp.exp(s)
        p = p * pl.reciprocal(jnp.sum(p, axis=-1, keepdims=True), approx=True)
        ctx = jnp.dot(p.astype(v.dtype), v, preferred_element_type=jnp.float32)
        # Stream each head's context straight into its output columns -- no
        # n_heads-way concatenate, flat vreg pressure.
        o_ref[:, lo:lo + head_dim] = ctx.astype(o_ref.dtype)


def pallas_mha(x2d, wqkv, bqkv, add_mask, batch, seq, n_heads,
               out_dtype=jnp.bfloat16):
    # x2d: (B*S, H) token-major hidden states; wqkv: (H, 3H) = [Wq | Wk | Wv];
    # add_mask: (B, 1, S) additive key mask.
    M, H = x2d.shape
    three_h = wqkv.shape[1]
    head_dim = H // n_heads
    scale = 1.0 / math.sqrt(head_dim)
    vmem_limit, _ = _vmem_caps()
    cost = pl.CostEstimate(
        flops=2 * M * H * three_h + 4 * batch * n_heads * seq * seq * head_dim,
        transcendentals=batch * n_heads * seq * seq,
        bytes_accessed=2 * (2 * M * H + H * three_h) + 4 * batch * seq)
    # TODO(synk): for S >= 1024 restructure as a flash-style online-softmax loop
    # over KV blocks (plus a head-group grid axis) instead of dense SxS scores.
    return pl.pallas_call(
        functools.partial(_mha_kernel, n_heads=n_heads, head_dim=head_dim,
                          hidden=H, scale=scale),
        out_shape=jax.ShapeDtypeStruct((M, H), out_dtype),
        grid=(batch,),
        in_specs=[
            pl.BlockSpec((seq, H), lambda b: (b, 0)),
            pl.BlockSpec((H, three_h), lambda b: (0, 0)),   # resident in VMEM
            pl.BlockSpec((1, three_h), lambda b: (0, 0)),
            pl.BlockSpec((None, 1, seq), lambda b: (b, 0, 0)),
        ],
        out_specs=pl.BlockSpec((seq, H), lambda b: (b, 0)),
        compiler_params=pltpu.CompilerParams(
            dimension_semantics=("parallel",),
            vmem_limit_bytes=vmem_limit),
        cost_estimate=cost,
    )(x2d, wqkv, bqkv.reshape(1, three_h), add_mask)


# ---------------------- fused pooler (tanh) + classifier -----------------------

def _pooler_classifier_kernel(x_ref, wp_ref, bp_ref, wc_ref, bc_ref, o_ref):
    pooled = jnp.tanh(
        jnp.dot(x_ref[...], wp_ref[...], preferred_element_type=jnp.float32)
        + bp_ref[...].astype(jnp.float32))
    logits = (jnp.dot(pooled.astype(wc_ref.dtype), wc_ref[...],
                      preferred_element_type=jnp.float32)
              + bc_ref[...].astype(jnp.float32))
    o_ref[...] = logits.astype(o_ref.dtype)


def pallas_pooler_classifier(cls_tok, wp, bp, wc, bc):
    B, H = cls_tok.shape
    L = wc.shape[1]
    vmem_limit, _ = _vmem_caps()
    return pl.pallas_call(
        _pooler_classifier_kernel,
        out_shape=jax.ShapeDtypeStruct((B, L), jnp.float32),
        grid=(1,),
        in_specs=[
            pl.BlockSpec((B, H), lambda i: (0, 0)),
            pl.BlockSpec((H, H), lambda i: (0, 0)),
            pl.BlockSpec((1, H), lambda i: (0, 0)),
            pl.BlockSpec((H, L), lambda i: (0, 0)),
            pl.BlockSpec((1, L), lambda i: (0, 0)),
        ],
        out_specs=pl.BlockSpec((B, L), lambda i: (0, 0)),
        compiler_params=pltpu.CompilerParams(vmem_limit_bytes=vmem_limit),
    )(cls_tok, wp, bp.reshape(1, H), wc, bc.reshape(1, L))


# ---------------------------------- Parameters ---------------------------------

def init_params(key, *, vocab_size, max_pos, type_vocab, hidden, n_layers,
                n_heads, intermediate, num_labels):
    def nrm(k, shape, dtype=jnp.bfloat16):
        return (0.02 * jax.random.normal(k, shape, jnp.float32)).astype(dtype)

    keys = jax.random.split(key, 4 + n_layers)
    params = {
        "n_heads": n_heads,
        "word_emb": nrm(keys[0], (vocab_size, hidden), jnp.float32),
        "pos_emb": nrm(keys[1], (max_pos, hidden), jnp.float32),
        "type_emb": nrm(keys[2], (type_vocab, hidden), jnp.float32),
        "emb_ln_g": jnp.ones((hidden,), jnp.float32),
        "emb_ln_b": jnp.zeros((hidden,), jnp.float32),
        "layers": [],
    }
    for l in range(n_layers):
        lk = jax.random.split(keys[4 + l], 6)
        wq = nrm(lk[0], (hidden, hidden))
        wk = nrm(lk[1], (hidden, hidden))
        wv = nrm(lk[2], (hidden, hidden))
        params["layers"].append({
            # fused QKV projection weight: [Wq | Wk | Wv] along the output dim,
            # heads in natural order within each slab.
            "wqkv": jnp.concatenate([wq, wk, wv], axis=1),
            "bqkv": jnp.zeros((3 * hidden,), jnp.float32),
            "wo": nrm(lk[3], (hidden, hidden)),
            "bo": jnp.zeros((hidden,), jnp.float32),
            "ln1_g": jnp.ones((hidden,), jnp.float32),
            "ln1_b": jnp.zeros((hidden,), jnp.float32),
            "w1": nrm(lk[4], (hidden, intermediate)),
            "b1": jnp.zeros((intermediate,), jnp.float32),
            "w2": nrm(lk[5], (intermediate, hidden)),
            "b2": jnp.zeros((hidden,), jnp.float32),
            "ln2_g": jnp.ones((hidden,), jnp.float32),
            "ln2_b": jnp.zeros((hidden,), jnp.float32),
        })
    pk = jax.random.split(keys[3], 2)
    params["pooler_w"] = nrm(pk[0], (hidden, hidden))
    params["pooler_b"] = jnp.zeros((hidden,), jnp.float32)
    params["cls_w"] = nrm(pk[1], (hidden, num_labels))
    params["cls_b"] = jnp.zeros((num_labels,), jnp.float32)
    return params


# ----------------------------------- Forward -----------------------------------

def bert_multi_seq_classification(params, input_ids, attention_mask, token_type_ids):
    B, S = input_ids.shape
    H = params["word_emb"].shape[1]
    nH = params["n_heads"]

    # Embedding gathers are glue (XLA); the summed embedding is handed to the
    # LN kernel in bf16 (stats are computed in f32 inside the kernel), halving
    # the LN's HBM read versus an f32 hand-off.
    x = (jnp.take(params["word_emb"], input_ids, axis=0)
         + params["pos_emb"][None, :S, :]
         + jnp.take(params["type_emb"], token_type_ids, axis=0))
    x2d = pallas_layernorm(x.reshape(B * S, H).astype(jnp.bfloat16),
                           params["emb_ln_g"], params["emb_ln_b"])

    add_mask = ((1.0 - attention_mask.astype(jnp.float32)) * -1e9).reshape(B, 1, S)

    for lp in params["layers"]:
        # fused QKV projection + multi-head self-attention (one kernel)
        ctx = pallas_mha(x2d, lp["wqkv"], lp["bqkv"], add_mask, B, S, nH)
        # attention output projection + residual + LayerNorm (fused epilogue)
        x2d = pallas_linear_add_ln(ctx, lp["wo"], lp["bo"], x2d,
                                   lp["ln1_g"], lp["ln1_b"])
        # FFN up-projection + exact GELU
        h = pallas_linear(x2d, lp["w1"], lp["b1"], act="gelu")
        # FFN down-projection + residual + LayerNorm (fused epilogue)
        x2d = pallas_linear_add_ln(h, lp["w2"], lp["b2"], x2d,
                                   lp["ln2_g"], lp["ln2_b"])

    cls_tok = x2d.reshape(B, S, H)[:, 0, :]                           # (B, H)
    # TODO(synk): nn.Dropout is identity in eval mode; treated as identity here.
    logits = pallas_pooler_classifier(cls_tok, params["pooler_w"],
                                      params["pooler_b"],
                                      params["cls_w"], params["cls_b"])
    return logits


# ------------------------------------- Main ------------------------------------

if __name__ == "__main__":
    key = jax.random.PRNGKey(0)
    B, S, H = 2, 8, 32
    n_heads, n_layers, intermediate = 2, 2, 64
    vocab_size, max_pos, type_vocab, num_labels = 50, 16, 2, 3

    pkey, ikey = jax.random.split(key)
    params = init_params(pkey, vocab_size=vocab_size, max_pos=max_pos,
                         type_vocab=type_vocab, hidden=H, n_layers=n_layers,
                         n_heads=n_heads, intermediate=intermediate,
                         num_labels=num_labels)

    input_ids = jax.random.randint(ikey, (B, S), 0, vocab_size, dtype=jnp.int32)
    attention_mask = jnp.ones((B, S), jnp.int32).at[1, -2:].set(0)  # some padding
    token_type_ids = jnp.zeros((B, S), jnp.int32)

    logits = bert_multi_seq_classification(params, input_ids, attention_mask,
                                           token_type_ids)
    logits = jax.block_until_ready(logits)
    assert logits.shape == (B, num_labels)
    print("KERNEL_OK")
</pallas_src>

<mosaic_0001>
module attributes {stable_mosaic.version = 11 : i64} {
  func.func @_ln_kernel(%arg0: i32, %arg1: memref<16x32xbf16, #tpu.memory_space<vmem>>, %arg2: memref<1x32xf32, #tpu.memory_space<vmem>>, %arg3: memref<1x32xf32, #tpu.memory_space<vmem>>, %arg4: memref<16x32xbf16, #tpu.memory_space<vmem>>) attributes {dimension_semantics = [#tpu.dimension_semantics<parallel>], iteration_bounds = array<i64: 1>, scalar_prefetch = 0 : i64, scratch_operands = 0 : i64, tpu.core_type = #tpu.core_type<tc>, window_params = [{transform_indices = @transform_0, window_bounds = array<i64: 16, 32>}, {pipeline_mode = #tpu.pipeline_mode<synchronous>, transform_indices = @transform_1, window_bounds = array<i64: 1, 32>}, {pipeline_mode = #tpu.pipeline_mode<synchronous>, transform_indices = @transform_2, window_bounds = array<i64: 1, 32>}, {transform_indices = @transform_3, window_bounds = array<i64: 16, 32>}]} {
    %c0 = arith.constant 0 : index
    %c0_0 = arith.constant 0 : index
    %0 = vector.load %arg1[%c0, %c0_0] : memref<16x32xbf16, #tpu.memory_space<vmem>>, vector<16x32xbf16>
    %1 = arith.extf %0 : vector<16x32xbf16> to vector<16x32xf32>
    %cst = arith.constant dense<0.000000e+00> : vector<16xf32>
    %2 = vector.multi_reduction <add>, %1, %cst [1] : vector<16x32xf32> to vector<16xf32>
    %3 = vector.shape_cast %2 : vector<16xf32> to vector<16x1xf32>
    %cst_1 = arith.constant 3.200000e+01 : f32
    %4 = vector.broadcast %cst_1 : f32 to vector<16x1xf32>
    %5 = arith.divf %3, %4 : vector<16x1xf32>
    %6 = vector.broadcast %5 : vector<16x1xf32> to vector<16x32xf32>
    %7 = arith.subf %1, %6 : vector<16x32xf32>
    %8 = arith.mulf %7, %7 : vector<16x32xf32>
    %cst_2 = arith.constant dense<0.000000e+00> : vector<16xf32>
    %9 = vector.multi_reduction <add>, %8, %cst_2 [1] : vector<16x32xf32> to vector<16xf32>
    %10 = vector.shape_cast %9 : vector<16xf32> to vector<16x1xf32>
    %cst_3 = arith.constant 3.200000e+01 : f32
    %11 = vector.broadcast %cst_3 : f32 to vector<16x1xf32>
    %12 = arith.divf %10, %11 : vector<16x1xf32>
    %13 = vector.broadcast %5 : vector<16x1xf32> to vector<16x32xf32>
    %14 = arith.subf %1, %13 : vector<16x32xf32>
    %cst_4 = arith.constant 9.99999996E-13 : f32
    %15 = vector.broadcast %cst_4 : f32 to vector<16x1xf32>
    %16 = arith.addf %12, %15 : vector<16x1xf32>
    %17 = math.rsqrt %16 : vector<16x1xf32>
    %18 = vector.broadcast %17 : vector<16x1xf32> to vector<16x32xf32>
    %19 = arith.mulf %14, %18 : vector<16x32xf32>
    %c0_5 = arith.constant 0 : index
    %c0_6 = arith.constant 0 : index
    %20 = vector.load %arg2[%c0_5, %c0_6] : memref<1x32xf32, #tpu.memory_space<vmem>>, vector<1x32xf32>
    %21 = vector.broadcast %20 : vector<1x32xf32> to vector<16x32xf32>
    %22 = arith.mulf %19, %21 : vector<16x32xf32>
    %c0_7 = arith.constant 0 : index
    %c0_8 = arith.constant 0 : index
    %23 = vector.load %arg3[%c0_7, %c0_8] : memref<1x32xf32, #tpu.memory_space<vmem>>, vector<1x32xf32>
    %24 = vector.broadcast %23 : vector<1x32xf32> to vector<16x32xf32>
    %25 = arith.addf %22, %24 : vector<16x32xf32>
    %26 = arith.truncf %25 : vector<16x32xf32> to vector<16x32xbf16>
    %c0_9 = arith.constant 0 : index
    %c0_10 = arith.constant 0 : index
    %27 = vector.load %arg4[%c0_9, %c0_10] : memref<16x32xbf16, #tpu.memory_space<vmem>>, vector<16x32xbf16>
    tpu.vector_store %arg4[%c0_9, %c0_10], %26 {strides = array<i32>} : memref<16x32xbf16, #tpu.memory_space<vmem>>, vector<16x32xbf16>,
    return
  }
  func.func @transform_0(%arg0: i32) -> (i32, i32) {
    %c0_i32 = arith.constant 0 : i32
    %c0_i32_0 = arith.constant 0 : i32
    return %arg0, %c0_i32 : i32, i32
  }
  func.func @transform_1(%arg0: i32) -> (i32, i32) {
    %c0_i32 = arith.constant 0 : i32
    %c0_i32_0 = arith.constant 0 : i32
    %c0_i32_1 = arith.constant 0 : i32
    return %c0_i32, %c0_i32_0 : i32, i32
  }
  func.func @transform_2(%arg0: i32) -> (i32, i32) {
    %c0_i32 = arith.constant 0 : i32
    %c0_i32_0 = arith.constant 0 : i32
    %c0_i32_1 = arith.constant 0 : i32
    return %c0_i32, %c0_i32_0 : i32, i32
  }
  func.func @transform_3(%arg0: i32) -> (i32, i32) {
    %c0_i32 = arith.constant 0 : i32
    %c0_i32_0 = arith.constant 0 : i32
    return %arg0, %c0_i32 : i32, i32
  }
}

</mosaic_0001>

<llo_original>
// kernel: tpu_custom_call.1
$region0: #{tpu_custom_call.1}
  #allocation0 [shape = 'u32[]', space=smem, size = 0x4, offset = 0x4, fixed_abs, tag = 'smem constant byte address 0x4 - core index']
  #allocation1 [shape = 'u32[144,128]{1,0:T(1,128)}', space=vmem, size = 0x12000, scoped, tag = 'internal scratch']
  %s0 = inlined_call_operand.hbm [shape: bf16[16,32], index: 0, kind: input, shape index: {}]
  %s1 = inlined_call_operand.vmem [shape: f32[1,32], index: 1, kind: input, shape index: {}]
  %s2 = inlined_call_operand.vmem [shape: f32[1,32], index: 2, kind: input, shape index: {}]
  %s3 = inlined_call_operand.hbm [shape: bf16[16,32], index: 3, kind: output, shape index: {}]
  %s4 = sld [smem:[#allocation0]]
  $region26: #{tpu_custom_call.1} parent=0
    _
  %s6 = ssub.s32 1, %s4
  %s7 = scalar_select 0, %s6, %s4
  $region1: #{tpu_custom_call.1} parent=0
    #allocation2 [shape = 'u8[4096]{0}', space=vmem, size = 0x1000, scoped, tag = 'input window, operand 0, single buffered']
    #allocation3 [shape = 's32[1]{0}', space=sflag, size = 0x4, scoped, tag = 'scoped memory for tpu_custom_call.1']
    #allocation4 [shape = 's32[1]{0}', space=sflag, size = 0x4, scoped, tag = 'scoped memory for tpu_custom_call.1']
    #allocation5 [shape = 'u8[4096]{0}', space=vmem, size = 0x1000, scoped, tag = 'output window, operand 0, single buffered']
    %8 = vsyncpa [#allocation3], 0
    %9 = vsyncpa [#allocation4], 0
    // Predicated region
    $region2: #{tpu_custom_call.1} parent=1 // pred_check
      _
    $region3: #{tpu_custom_call.1} parent=1 // pred_check_branch
      %11 = sbr.rel (0) target = $region5
    $region4: #{tpu_custom_call.1} parent=1 // pred_region
      %s13 = ssub.s32 128, 128
      %14 = vsyncadd [#allocation3], %s13
      %s15 = sshll.u32 [#allocation2], 4
      %s16 = int_to_ptr.vmem [resolvable:$true] %s15
      %21 = dma.hbm_to_vmem [thread:$0]  %s0, 128, %s16, [#allocation3], 64, 64, 4
    $region5: #{tpu_custom_call.1} parent=1 // pred_fallthru
      _
    // Predicated region
    $region6: #{tpu_custom_call.1} parent=1 // pred_check
      _
    $region7: #{tpu_custom_call.1} parent=1 // pred_check_branch
      %23 = sbr.rel (0) target = $region9
    $region8: #{tpu_custom_call.1} parent=1 // pred_region
      _
    $region9: #{tpu_custom_call.1} parent=1 // pred_fallthru
      _
    // Predicated region
    $region10: #{tpu_custom_call.1} parent=1 // pred_check
      _
    $region11: #{tpu_custom_call.1} parent=1 // pred_check_branch
      %25 = sbr.rel (0) target = $region13
    $region12: #{tpu_custom_call.1} parent=1 // pred_region
      _
    $region13: #{tpu_custom_call.1} parent=1 // pred_fallthru
      _
    // Predicated region
    $region14: #{tpu_custom_call.1} parent=1 // pred_check
      _
    $region15: #{tpu_custom_call.1} parent=1 // pred_check_branch
      %27 = sbr.rel (0) target = $region17
    $region16: #{tpu_custom_call.1} parent=1 // pred_region
      %28 = dma.done [#allocation3], 128
    $region17: #{tpu_custom_call.1} parent=1 // pred_fallthru
      _
    %v29 = vld [vmem:[#allocation2] sm:$0xf]
    %v30 = vld [vmem:[#allocation2 + $0x4] sm:$0xf]
    %v31 = vunpack.c.l.bf16 %v29
    %v32 = vunpack.c.l.bf16 %v30
    %vm33 = vcmask 261120
    %v34 = vsel %vm33, %v31, 0.0
    %35 = vadd.xlane.f32.xlu0 %v34
    %v36 = vpop.xlane.xlu0 %35
    %v37 = vsel %vm33, %v32, 0.0
    %38 = vadd.xlane.f32.xlu0 %v37
    %v39 = vpop.xlane.xlu0 %38
    %v40 = vrcp.pop 32.0
    %v41 = vmul.f32 %v36, %v40
    %v42 = vmul.f32 %v39, %v40
    %v43 = vsub.f32 %v31, %v41
    %v44 = vsub.f32 %v32, %v42
    %v45 = vmul.f32 %v43, %v43
    %v46 = vmul.f32 %v44, %v44
    %v47 = vsel %vm33, %v45, 0.0
    %48 = vadd.xlane.f32.xlu0 %v47
    %v49 = vpop.xlane.xlu0 %48
    %v50 = vsel %vm33, %v46, 0.0
    %51 = vadd.xlane.f32.xlu0 %v50
    %v52 = vpop.xlane.xlu0 %51
    %v53 = vmul.f32 %v49, %v40
    %v54 = vmul.f32 %v52, %v40
    %v55 = vadd.f32 %v53, 1e-12
    %v56 = vadd.f32 %v54, 1e-12
    %v57 = vrsqrt.pop %v55
    %v58 = vrsqrt.pop %v56
    %v59 = vmul.f32 %v43, %v57
    %v60 = vmul.f32 %v44, %v58
    %v61 = vld [vmem:[%s1] sm:$0x1]
    %v63 = vlaneseq
    %v64 = vshrl.u32 %v63, 7
    %v65 = vsub.s32 0, %v64
    %v66 = vrot.slane %v61, %v65
    %v68 = vmul.f32 %v59, %v66
    %v69 = vmul.f32 %v60, %v66
    %v70 = vld [vmem:[%s2] sm:$0x1]
    %v72 = vlaneseq
    %v73 = vshrl.u32 %v72, 7
    %v74 = vsub.s32 0, %v73
    %v75 = vrot.slane %v70, %v74
    %v77 = vadd.f32 %v68, %v75
    %v78 = vadd.f32 %v69, %v75
    %v79 = vpack.c.bf16 %v78, %v77
    %v81 = vunpack.c.l.b16 %v79
    %v82 = vunpack.c.h.b16 %v79
    %v83 = vpack.c.b16 %v81, %v81
    %v84 = vpack.c.b16 %v82, %v82
    %vm87 = vcmask 257024
    %88 = vst.msk [vmem:[#allocation5] sm:$0xf] %vm87, %v83
    %89 = vst.msk [vmem:[#allocation5 + $0x4] sm:$0xf] %vm87, %v84
    // Predicated region
    $region18: #{tpu_custom_call.1} parent=1 // pred_check
      _
    $region19: #{tpu_custom_call.1} parent=1 // pred_check_branch
      %91 = sbr.rel (0) target = $region21
    $region20: #{tpu_custom_call.1} parent=1 // pred_region
      %s93 = ssub.s32 128, 128
      %94 = vsyncadd [#allocation4], %s93
      %s95 = sshll.u32 [#allocation5], 4
      %s96 = int_to_ptr.vmem [resolvable:$true] %s95
      %101 = dma.vmem_to_hbm [thread:$0]  %s96, 128, %s3, [#allocation4], 64, 64, 4
    $region21: #{tpu_custom_call.1} parent=1 // pred_fallthru
      _
    // Predicated region
    $region22: #{tpu_custom_call.1} parent=1 // pred_check
      _
    $region23: #{tpu_custom_call.1} parent=1 // pred_check_branch
      %103 = sbr.rel (0) target = $region25
    $region24: #{tpu_custom_call.1} parent=1 // pred_region
      %104 = dma.done [#allocation4], 128
    $region25: #{tpu_custom_call.1} parent=1 // pred_fallthru
      _
    %105 = vsyncpa [#allocation3], 1
    %106 = vsyncpa [#allocation4], 1

</llo_original>
